<compile_context>
chip_gen: v7x
topology: tpu7x:2x2x1
jax: 0.10.0
libtpu: 0.0.40
codegen_flags: <defaults>
</compile_context>

<pallas_src>
import functools

import jax
import jax.numpy as jnp
from jax.experimental import pallas as pl
from jax.experimental.pallas import tpu as pltpu


def _round_up(x, m):
    return (x + m - 1) // m * m


# ---------------------------------------------------------------------------
# Kernels
# ---------------------------------------------------------------------------
def _fused_kernel(x_ref, w_ref, b_ref, o_ref, *, tn, feat):
    """Single-pass kernel: whole contraction dim resident.

    x_ref: [TB, feat]  (input dtype)     -- resident across the output-tile axis
    w_ref: [feat, TN]  (MXU dtype, bf16) -- pre-transposed torch weight chunk
    b_ref: [1, TN]     (f32)
    o_ref: [TB, TN]    (input dtype)
    """
    x = x_ref[...]
    fx = jnp.dot(x.astype(w_ref.dtype), w_ref[...],
                 preferred_element_type=jnp.float32)
    fx = fx + b_ref[...]
    if tn == feat:
        x_out = x
    else:
        off = pl.multiple_of(pl.program_id(1) * tn, tn)
        x_out = x_ref[:, pl.ds(off, tn)]
    o_ref[...] = (x_out.astype(jnp.float32) * fx).astype(o_ref.dtype)


def _accum_kernel(xk_ref, xo_ref, w_ref, b_ref, o_ref, acc_ref):
    """K-tiled fallback (very large N): f32 VMEM accumulator across the K axis.

    xk_ref: [TB, TK]  k-th contraction chunk of x
    xo_ref: [TB, TN]  j-th output-column chunk of x (for the final x * fx)
    w_ref : [TK, TN]  pre-transposed weight tile
    """
    k = pl.program_id(2)

    @pl.when(k == 0)
    def _():
        acc_ref[...] = jnp.zeros_like(acc_ref)

    acc_ref[...] += jnp.dot(xk_ref[...].astype(w_ref.dtype), w_ref[...],
                            preferred_element_type=jnp.float32)

    @pl.when(k == pl.num_programs(2) - 1)
    def _():
        fx = acc_ref[...] + b_ref[...]
        o_ref[...] = (xo_ref[...].astype(jnp.float32) * fx).astype(o_ref.dtype)


# ---------------------------------------------------------------------------
# Wrapper
# ---------------------------------------------------------------------------
def single_layer_multiplied(t, x, weight, bias, *, mxu_dtype=jnp.bfloat16,
                            tb_cap=512, tn_cap=None, force_k_tiling=False):
    """Forward of SingleLayerMultiplied: y = x * (x @ weight.T + bias).

    `t` is unused (mirrors the PyTorch forward(t, x) signature).
    `weight` is torch nn.Linear layout [N_out, N_in]; `bias` is [N].
    MXU operands are fed in `mxu_dtype` (bf16 by default); accumulation, bias
    add and the final x*fx product are f32.
    """
    del t
    B, N = x.shape
    assert weight.shape == (N, N) and bias.shape == (N,)

    x_itemsize = jnp.dtype(x.dtype).itemsize
    w_itemsize = jnp.dtype(mxu_dtype).itemsize

    # --- VMEM budget from the actual part (fallback: v7x-sized 64 MiB). ------
    try:
        vmem_cap = int(pltpu.get_tpu_info().vmem_capacity_bytes)
        if vmem_cap <= 0:
            raise ValueError("bad vmem capacity")
    except Exception:  # off-TPU tracing / older runtimes
        vmem_cap = 64 << 20
    budget = (vmem_cap * 3) // 4          # leave headroom for Mosaic internals

    n_pad0 = _round_up(max(N, 1), 128)    # lane-aligned feature dim
    b_al = _round_up(max(B, 1), 8)        # sublane-aligned batch

    tb_cands = [c for c in (512, 256, 128, 64, 32, 16, 8)
                if c <= min(tb_cap, max(b_al, 8))] or [8]

    def fused_bytes(tb, tn):
        p = _round_up(n_pad0, tn)
        return (2 * tb * p * x_itemsize      # x row blocks (double-buffered)
                + 2 * p * tn * w_itemsize    # weight blocks
                + 2 * tn * 4                 # bias blocks
                + 2 * tb * tn * x_itemsize)  # output blocks

    def pick_fused():
        # Pass 1: output dim NOT tiled -> weight block index is constant and W
        # is streamed from HBM exactly once per call.
        if tn_cap is None or n_pad0 <= tn_cap:
            for tb in tb_cands:
                if fused_bytes(tb, n_pad0) <= budget:
                    return tb, n_pad0
        # Pass 2: output dim tiled.  Maximize the batch tile first: weight HBM
        # traffic scales with ceil(B / tb) once the output is tiled.
        tn_cands = [c for c in (4096, 2048, 1024, 512, 256, 128)
                    if c < n_pad0 and (tn_cap is None or c <= tn_cap)]
        for tb in tb_cands:
            for tn in tn_cands:
                if fused_bytes(tb, tn) <= budget:
                    return tb, tn
        return None

    def accum_bytes(tb, tf):
        return (2 * tb * tf * x_itemsize      # x contraction chunks
                + 2 * tb * tf * x_itemsize    # x output-column chunks
                + 2 * tf * tf * w_itemsize    # weight tiles
                + 2 * tf * 4                  # bias
                + 2 * tb * tf * x_itemsize    # output
                + tb * tf * 4)                # f32 accumulator scratch

    def pick_accum():
        tf_cands = [c for c in (512, 256, 128)
                    if tn_cap is None or c <= tn_cap] or [128]
        for tb in tb_cands:
            for tf in tf_cands:
                if accum_bytes(tb, tf) <= budget:
                    return tb, tf
        return 8, 128

    fused_cfg = None if force_k_tiling else pick_fused()

    # --- One-time weight prep (outside the kernel, amortized over all tiles). -
    # torch layout [out, in] -> canonical MXU stationary layout [in, out].
    w_t = weight.T.astype(mxu_dtype)
    bias_f32 = bias.astype(jnp.float32)
    out_dtype = x.dtype

    if fused_cfg is not None:
        tb, tn = fused_cfg
        feat = _round_up(n_pad0, tn)          # padded feature dim (in == out)
        nj = feat // tn
        # Megacore: make sure the parallel grid has >= 2 iterations when B allows.
        if nj == 1 and _round_up(B, tb) <= tb and b_al >= 16:
            tb = _round_up((b_al + 1) // 2, 8)
        b_pad = _round_up(B, tb)
        nb = b_pad // tb

        x_p = jnp.pad(x, ((0, b_pad - B), (0, feat - N)))
        w_p = jnp.pad(w_t, ((0, feat - N), (0, feat - N)))
        b_p = jnp.pad(bias_f32, (0, feat - N)).reshape(1, feat)

        need = fused_bytes(tb, tn)
        vmem_limit = min(max(need + (4 << 20), 32 << 20), (vmem_cap * 9) // 10)

        out_p = pl.pallas_call(
            functools.partial(_fused_kernel, tn=tn, feat=feat),
            out_shape=jax.ShapeDtypeStruct((b_pad, feat), out_dtype),
            grid=(nb, nj),
            in_specs=[
                pl.BlockSpec((tb, feat), lambda i, j: (i, 0)),   # x (full K resident)
                pl.BlockSpec((feat, tn), lambda i, j: (0, j)),   # W.T chunk
                pl.BlockSpec((1, tn), lambda i, j: (0, j)),      # bias chunk
            ],
            out_specs=pl.BlockSpec((tb, tn), lambda i, j: (i, j)),
            compiler_params=pltpu.CompilerParams(
                dimension_semantics=("parallel", "parallel"),
                vmem_limit_bytes=vmem_limit,
            ),
        )(x_p, w_p, b_p)
        return out_p[:B, :N]

    # --- K-tiled fallback (N too large for a resident contraction dim). ------
    tb, tf = pick_accum()
    feat = _round_up(n_pad0, tf)
    b_pad = _round_up(B, tb)
    nb, nf = b_pad // tb, feat // tf

    x_p = jnp.pad(x, ((0, b_pad - B), (0, feat - N)))
    w_p = jnp.pad(w_t, ((0, feat - N), (0, feat - N)))
    b_p = jnp.pad(bias_f32, (0, feat - N)).reshape(1, feat)

    need = accum_bytes(tb, tf)
    vmem_limit = min(max(need + (4 << 20), 32 << 20), (vmem_cap * 9) // 10)

    out_p = pl.pallas_call(
        _accum_kernel,
        out_shape=jax.ShapeDtypeStruct((b_pad, feat), out_dtype),
        grid=(nb, nf, nf),                       # (batch, out-cols, K); K last
        in_specs=[
            pl.BlockSpec((tb, tf), lambda i, j, k: (i, k)),   # x, K chunk
            pl.BlockSpec((tb, tf), lambda i, j, k: (i, j)),   # x, output-col chunk
            pl.BlockSpec((tf, tf), lambda i, j, k: (k, j)),   # W.T tile
            pl.BlockSpec((1, tf), lambda i, j, k: (0, j)),    # bias chunk
        ],
        out_specs=pl.BlockSpec((tb, tf), lambda i, j, k: (i, j)),
        scratch_shapes=[pltpu.VMEM((tb, tf), jnp.float32)],
        compiler_params=pltpu.CompilerParams(
            dimension_semantics=("parallel", "parallel", "arbitrary"),
            vmem_limit_bytes=vmem_limit,
        ),
    )(x_p, x_p, w_p, b_p)
    return out_p[:B, :N]


if __name__ == "__main__":
    key = jax.random.PRNGKey(0)
    t = jnp.zeros((), jnp.float32)   # unused, mirrors forward(t, x)

    def make_case(case_key, batch, n):
        kx, kw, kb = jax.random.split(case_key, 3)
        bound = 1.0 / (n ** 0.5)
        w = jax.random.uniform(kw, (n, n), jnp.float32, -bound, bound)
        b = jax.random.uniform(kb, (n,), jnp.float32, -bound, bound)
        x = jax.random.normal(kx, (batch, n), jnp.float32)
        return x, w, b

    def reference(x, w, b, mxu_dtype=jnp.bfloat16):
        # Matches the kernel's operand precision: MXU operands in bf16,
        # accumulation / bias / final x*fx multiply in f32.
        xq = x.astype(mxu_dtype).astype(jnp.float32)
        wq = w.astype(mxu_dtype).astype(jnp.float32)
        return x * (xq @ wq.T + b)

    # Case 1: tiny demo shape (B=8, N=32) -> single-block fused path.
    x, w, b = make_case(jax.random.fold_in(key, 0), 8, 32)
    y = jax.block_until_ready(single_layer_multiplied(t, x, w, b))
    assert y.shape == x.shape
    assert jnp.allclose(y, reference(x, w, b), atol=1e-3, rtol=1e-3)

    # Case 2: batch + output-dim tiling in the fused path
    # (exercises the dynamic x column slice and a multi-tile parallel grid).
    x, w, b = make_case(jax.random.fold_in(key, 1), 24, 160)
    y = jax.block_until_ready(
        single_layer_multiplied(t, x, w, b, tb_cap=16, tn_cap=128))
    assert jnp.allclose(y, reference(x, w, b), atol=1e-3, rtol=1e-3)

    # Case 3: forced K-tiled accumulator fallback (only used for huge N).
    x, w, b = make_case(jax.random.fold_in(key, 2), 16, 160)
    y = jax.block_until_ready(
        single_layer_multiplied(t, x, w, b, tb_cap=8, tn_cap=128,
                                force_k_tiling=True))
    assert jnp.allclose(y, reference(x, w, b), atol=1e-3, rtol=1e-3)

    print("KERNEL_OK")
</pallas_src>

<mosaic_0001>
module attributes {stable_mosaic.version = 11 : i64} {
  func.func @_fused_kernel(%arg0: i32, %arg1: i32, %arg2: memref<8x128xf32, #tpu.memory_space<vmem>>, %arg3: memref<128x128xbf16, #tpu.memory_space<vmem>>, %arg4: memref<1x128xf32, #tpu.memory_space<vmem>>, %arg5: memref<8x128xf32, #tpu.memory_space<vmem>>) attributes {dimension_semantics = [#tpu.dimension_semantics<parallel>, #tpu.dimension_semantics<parallel>], iteration_bounds = array<i64: 1, 1>, scalar_prefetch = 0 : i64, scratch_operands = 0 : i64, tpu.core_type = #tpu.core_type<tc>, window_params = [{transform_indices = @transform_0, window_bounds = array<i64: 8, 128>}, {transform_indices = @transform_1, window_bounds = array<i64: 128, 128>}, {transform_indices = @transform_2, window_bounds = array<i64: 1, 128>}, {transform_indices = @transform_3, window_bounds = array<i64: 8, 128>}]} {
    %c0 = arith.constant 0 : index
    %c0_0 = arith.constant 0 : index
    %0 = vector.load %arg2[%c0, %c0_0] : memref<8x128xf32, #tpu.memory_space<vmem>>, vector<8x128xf32>
    %1 = arith.truncf %0 : vector<8x128xf32> to vector<8x128xbf16>
    %c0_1 = arith.constant 0 : index
    %c0_2 = arith.constant 0 : index
    %2 = vector.load %arg3[%c0_1, %c0_2] : memref<128x128xbf16, #tpu.memory_space<vmem>>, vector<128x128xbf16>
    %cst = arith.constant dense<0.000000e+00> : vector<8x128xf32>
    %3 = tpu.matmul %1, %2, %cst {dimension_numbers = #tpu.dot_dimension_numbers<[1], [0], [0], [1], [0, 0, 1, 1], [], []>} : vector<8x128xbf16>, vector<128x128xbf16>, vector<8x128xf32> -> vector<8x128xf32>
    %c0_3 = arith.constant 0 : index
    %c0_4 = arith.constant 0 : index
    %4 = vector.load %arg4[%c0_3, %c0_4] : memref<1x128xf32, #tpu.memory_space<vmem>>, vector<1x128xf32>
    %5 = vector.broadcast %4 : vector<1x128xf32> to vector<8x128xf32>
    %6 = arith.addf %3, %5 : vector<8x128xf32>
    %7 = arith.mulf %0, %6 : vector<8x128xf32>
    %c0_5 = arith.constant 0 : index
    %c0_6 = arith.constant 0 : index
    %8 = vector.load %arg5[%c0_5, %c0_6] : memref<8x128xf32, #tpu.memory_space<vmem>>, vector<8x128xf32>
    tpu.vector_store %arg5[%c0_5, %c0_6], %7 {strides = array<i32>} : memref<8x128xf32, #tpu.memory_space<vmem>>, vector<8x128xf32>,
    return
  }
  func.func @transform_0(%arg0: i32, %arg1: i32) -> (i32, i32) {
    %c0_i32 = arith.constant 0 : i32
    %c0_i32_0 = arith.constant 0 : i32
    return %arg0, %c0_i32 : i32, i32
  }
  func.func @transform_1(%arg0: i32, %arg1: i32) -> (i32, i32) {
    %c0_i32 = arith.constant 0 : i32
    %c0_i32_0 = arith.constant 0 : i32
    return %c0_i32, %arg1 : i32, i32
  }
  func.func @transform_2(%arg0: i32, %arg1: i32) -> (i32, i32) {
    %c0_i32 = arith.constant 0 : i32
    %c0_i32_0 = arith.constant 0 : i32
    return %c0_i32, %arg1 : i32, i32
  }
  func.func @transform_3(%arg0: i32, %arg1: i32) -> (i32, i32) {
    %c0_i32 = arith.constant 0 : i32
    return %arg0, %arg1 : i32, i32
  }
}

</mosaic_0001>

<llo_original>
// kernel: tpu_custom_call.1
$region0: #{tpu_custom_call.1}
  #allocation0 [shape = 'u32[]', space=smem, size = 0x4, offset = 0x4, fixed_abs, tag = 'smem constant byte address 0x4 - core index']
  #allocation1 [shape = 'u32[144,128]{1,0:T(1,128)}', space=vmem, size = 0x12000, scoped, tag = 'internal scratch']
  %s0 = inlined_call_operand.hbm [shape: f32[8,128], index: 0, kind: input, shape index: {}]
  %s1 = inlined_call_operand.hbm [shape: bf16[128,128], index: 1, kind: input, shape index: {}]
  %s2 = inlined_call_operand.vmem [shape: f32[1,128], index: 2, kind: input, shape index: {}]
  %s3 = inlined_call_operand.hbm [shape: f32[8,128], index: 3, kind: output, shape index: {}]
  %s4 = sld [smem:[#allocation0]]
  $region30: #{tpu_custom_call.1} parent=0
    _
  %s6 = ssub.s32 1, %s4
  %s7 = scalar_select 0, %s6, %s4
  $region1: #{tpu_custom_call.1} parent=0
    #allocation2 [shape = 'u8[4096]{0}', space=vmem, size = 0x1000, scoped, tag = 'input window, operand 0, single buffered']
    #allocation3 [shape = 's32[1]{0}', space=sflag, size = 0x4, scoped, tag = 'scoped memory for tpu_custom_call.1']
    #allocation4 [shape = 's32[1]{0}', space=sflag, size = 0x4, scoped, tag = 'scoped memory for tpu_custom_call.1']
    #allocation5 [shape = 'u8[32768]{0}', space=vmem, size = 0x8000, scoped, tag = 'input window, operand 1, single buffered']
    #allocation6 [shape = 's32[1]{0}', space=sflag, size = 0x4, scoped, tag = 'scoped memory for tpu_custom_call.1']
    #allocation7 [shape = 'u8[4096]{0}', space=vmem, size = 0x1000, scoped, tag = 'output window, operand 0, single buffered']
    %8 = vsyncpa [#allocation3], 0
    %9 = vsyncpa [#allocation6], 0
    %10 = vsyncpa [#allocation4], 0
    // Predicated region
    $region2: #{tpu_custom_call.1} parent=1 // pred_check
      _
    $region3: #{tpu_custom_call.1} parent=1 // pred_check_branch
      %12 = sbr.rel (0) target = $region5
    $region4: #{tpu_custom_call.1} parent=1 // pred_region
      %s14 = ssub.s32 128, 128
      %15 = vsyncadd [#allocation3], %s14
      %s17 = sshll.u32 [#allocation2], 4
      %s18 = int_to_ptr.vmem [resolvable:$true] %s17
      %20 = dma.hbm_to_vmem [thread:$0]  %s0, 128, %s18, [#allocation3]
    $region5: #{tpu_custom_call.1} parent=1 // pred_fallthru
      _
    // Predicated region
    $region6: #{tpu_custom_call.1} parent=1 // pred_check
      _
    $region7: #{tpu_custom_call.1} parent=1 // pred_check_branch
      %22 = sbr.rel (0) target = $region9
    $region8: #{tpu_custom_call.1} parent=1 // pred_region
      %s24 = ssub.s32 1024, 1024
      %25 = vsyncadd [#allocation6], %s24
      %s26 = sshll.u32 [#allocation5], 4
      %s27 = int_to_ptr.vmem [resolvable:$true] %s26
      %32 = dma.hbm_to_vmem [thread:$0]  %s1, 1024, %s27, [#allocation6], 64, 64, 4
    $region9: #{tpu_custom_call.1} parent=1 // pred_fallthru
      _
    // Predicated region
    $region10: #{tpu_custom_call.1} parent=1 // pred_check
      _
    $region11: #{tpu_custom_call.1} parent=1 // pred_check_branch
      %34 = sbr.rel (0) target = $region13
    $region12: #{tpu_custom_call.1} parent=1 // pred_region
      _
    $region13: #{tpu_custom_call.1} parent=1 // pred_fallthru
      _
    // Predicated region
    $region14: #{tpu_custom_call.1} parent=1 // pred_check
      _
    $region15: #{tpu_custom_call.1} parent=1 // pred_check_branch
      %36 = sbr.rel (0) target = $region17
    $region16: #{tpu_custom_call.1} parent=1 // pred_region
      %37 = dma.done [#allocation3], 128
    $region17: #{tpu_custom_call.1} parent=1 // pred_fallthru
      _
    // Predicated region
    $region18: #{tpu_custom_call.1} parent=1 // pred_check
      _
    $region19: #{tpu_custom_call.1} parent=1 // pred_check_branch
      %39 = sbr.rel (0) target = $region21
    $region20: #{tpu_custom_call.1} parent=1 // pred_region
      %40 = dma.done [#allocation6], 1024
    $region21: #{tpu_custom_call.1} parent=1 // pred_fallthru
      _
    %v42 = vld [vmem:[#allocation2] sm:$0xff]
    %v43 = vpack.c.bf16 %v42, %v42
    %v44 = vld [vmem:[#allocation5] sm:$0xf]
    %v45 = vld [vmem:[#allocation5 + $0x4] sm:$0xf]
    %v46 = vld [vmem:[#allocation5 + $0x8] sm:$0xf]
    %v47 = vld [vmem:[#allocation5 + $0xc] sm:$0xf]
    %v48 = vld [vmem:[#allocation5 + $0x10] sm:$0xf]
    %v49 = vld [vmem:[#allocation5 + $0x14] sm:$0xf]
    %v50 = vld [vmem:[#allocation5 + $0x18] sm:$0xf]
    %v51 = vld [vmem:[#allocation5 + $0x1c] sm:$0xf]
    %v52 = vld [vmem:[#allocation5 + $0x20] sm:$0xf]
    %v53 = vld [vmem:[#allocation5 + $0x24] sm:$0xf]
    %v54 = vld [vmem:[#allocation5 + $0x28] sm:$0xf]
    %v55 = vld [vmem:[#allocation5 + $0x2c] sm:$0xf]
    %v56 = vld [vmem:[#allocation5 + $0x30] sm:$0xf]
    %v57 = vld [vmem:[#allocation5 + $0x34] sm:$0xf]
    %v58 = vld [vmem:[#allocation5 + $0x38] sm:$0xf]
    %v59 = vld [vmem:[#allocation5 + $0x3c] sm:$0xf]
    %v60 = vld [vmem:[%s2] sm:$0x1]
    %v62 = vlaneseq
    %v63 = vshrl.u32 %v62, 7
    %v64 = vsub.s32 0, %v63
    %v65 = vrot.slane %v60, %v64
    %v83 = vunpack.c.l.b16 %v44
    %v84 = vunpack.c.l.b16 %v45
    %v85 = vunpack.c.l.b16 %v46
    %v86 = vunpack.c.l.b16 %v47
    %v87 = vunpack.c.l.b16 %v48
    %v88 = vunpack.c.l.b16 %v49
    %v89 = vunpack.c.l.b16 %v50
    %v90 = vunpack.c.l.b16 %v51
    %v91 = vunpack.c.l.b16 %v52
    %v92 = vunpack.c.l.b16 %v53
    %v93 = vunpack.c.l.b16 %v54
    %v94 = vunpack.c.l.b16 %v55
    %v95 = vunpack.c.l.b16 %v56
    %v96 = vunpack.c.l.b16 %v57
    %v97 = vunpack.c.l.b16 %v58
    %v98 = vunpack.c.l.b16 %v59
    %v99 = vpack.c.b16 %v84, %v83
    %v100 = vpack.c.b16 %v86, %v85
    %v101 = vpack.c.b16 %v88, %v87
    %v102 = vpack.c.b16 %v90, %v89
    %v103 = vpack.c.b16 %v92, %v91
    %v104 = vpack.c.b16 %v94, %v93
    %v105 = vpack.c.b16 %v96, %v95
    %v106 = vpack.c.b16 %v98, %v97
    %115 = vmatprep.subr.bf16.mxu0 0
    %116 = vmatpush1.bf16.msra.mxu0 %v99
    %117 = vmatprep.subr.bf16.mxu0 0
    %118 = vmatpush1.bf16.msra.mxu0 %v100
    %119 = vmatprep.subr.bf16.mxu0 0
    %120 = vmatpush1.bf16.msra.mxu0 %v101
    %121 = vmatprep.subr.bf16.mxu0 0
    %122 = vmatpush1.bf16.msra.mxu0 %v102
    %123 = vmatprep.subr.bf16.mxu0 0
    %124 = vmatpush1.bf16.msra.mxu0 %v103
    %125 = vmatprep.subr.bf16.mxu0 0
    %126 = vmatpush1.bf16.msra.mxu0 %v104
    %127 = vmatprep.subr.bf16.mxu0 0
    %128 = vmatpush1.bf16.msra.mxu0 %v105
    %129 = vmatprep.subr.bf16.mxu0 0
    %130 = vmatpush1.bf16.msra.mxu0 %v106
    %131 = vmatprep.subr.bf16.mxu0 0
    %132 = vmatpush1.bf16.msra.mxu0 0
    %133 = vmatprep.subr.bf16.mxu0 0
    %134 = vmatpush1.bf16.msra.mxu0 0
    %135 = vmatprep.subr.bf16.mxu0 0
    %136 = vmatpush1.bf16.msra.mxu0 0
    %137 = vmatprep.subr.bf16.mxu0 0
    %138 = vmatpush1.bf16.msra.mxu0 0
    %139 = vmatprep.subr.bf16.mxu0 0
    %140 = vmatpush1.bf16.msra.mxu0 0
    %141 = vmatprep.subr.bf16.mxu0 0
    %142 = vmatpush1.bf16.msra.mxu0 0
    %143 = vmatprep.subr.bf16.mxu0 0
    %144 = vmatpush1.bf16.msra.mxu0 0
    %145 = vmatprep.subr.bf16.mxu0 0
    %146 = vmatpush1.bf16.msra.mxu0 0
    %147 = vmatprep.mubr.bf16.mxu0 0
    %148 = vmatmul.mubr.bf16.gmra.mrb[0].mxu0 %v43
    %v149 = vpop.f32.mrb[0].mxu0
    %v150 = vadd.f32 %v65, %v149
    %v151 = vpop.f32.mrb[0].mxu0
    %v152 = vpop.f32.mrb[0].mxu0
    %v153 = vpop.f32.mrb[0].mxu0
    %154 = vdwg.mxu0
    %v155 = vmul.f32 %v42, %v150
    %156 = vst [vmem:[#allocation7] sm:$0xff] %v155
    // Predicated region
    $region22: #{tpu_custom_call.1} parent=1 // pred_check
      _
    $region23: #{tpu_custom_call.1} parent=1 // pred_check_branch
      %158 = sbr.rel (0) target = $region25
    $region24: #{tpu_custom_call.1} parent=1 // pred_region
      %s160 = ssub.s32 128, 128
      %161 = vsyncadd [#allocation4], %s160
      %s163 = sshll.u32 [#allocation7], 4
      %s164 = int_to_ptr.vmem [resolvable:$true] %s163
      %166 = dma.vmem_to_hbm [thread:$0]  %s164, 128, %s3, [#allocation4]
    $region25: #{tpu_custom_call.1} parent=1 // pred_fallthru
      _
    // Predicated region
    $region26: #{tpu_custom_call.1} parent=1 // pred_check
      _
    $region27: #{tpu_custom_call.1} parent=1 // pred_check_branch
      %168 = sbr.rel (0) target = $region29
    $region28: #{tpu_custom_call.1} parent=1 // pred_region
      %169 = dma.done [#allocation4], 128
    $region29: #{tpu_custom_call.1} parent=1 // pred_fallthru
      _
    %170 = vsyncpa [#allocation3], 1
    %171 = vsyncpa [#allocation6], 1
    %172 = vsyncpa [#allocation4], 1

</llo_original>
